<compile_context>
chip_gen: v5e
topology: v5e:2x2
jax: 0.10.0
libtpu: 0.0.40
codegen_flags: <defaults>
</compile_context>

<pallas_src>
import functools

import jax
import jax.numpy as jnp
import numpy as np
from jax.experimental import pallas as pl
from jax.experimental.pallas import tpu as pltpu


_PAD_LOGIT = -30.0  # padded rows/columns contribute ~sig(-30)^gamma ~ 0


def _round_up(x, m):
    return ((x + m - 1) // m) * m


def _focal_kernel(inputs_ref, target_ref, partial_ref, *, gamma, alpha, classes):
    """Per-tile focal-loss partial sum.

    inputs_ref : (TILE_N, C_pad) logits (any float dtype, computed in f32)
    target_ref : (TILE_N, classes) int32 label indices in [0, C)
    partial_ref: (1, 1) f32 SMEM partial sum for this tile
    """
    x = inputs_ref[...].astype(jnp.float32)
    tgt = target_ref[...]
    tn, c = x.shape

    # One-hot positive mask built in-kernel: pos[n, c] = any_k (tgt[n, k] == c).
    # Seeded from the first compare (no zeros init); K is small and static.
    col = jax.lax.broadcasted_iota(jnp.int32, (tn, c), 1)
    pos = col == tgt[:, 0:1]
    for k in range(1, classes):
        pos = jnp.logical_or(pos, col == tgt[:, k:k + 1])

    # Unified positive/negative branch via sign flip:
    #   positives: (1 - sig(x))^g * log(sig(x))   = sig(-x)^g * log_sig(x)
    #   negatives: sig(x)^g * log(1 - sig(x))     = sig(-(-x))^g * log_sig(-x)
    # so with x_eff = where(pos, x, -x):
    #   contrib = w * sig(-x_eff)^g * log_sig(x_eff),  w = alpha | (1-alpha)
    x_eff = jnp.where(pos, x, -x)
    w = jnp.where(pos, alpha, 1.0 - alpha)

    # Stable shared pieces (|x_eff| == |x|):
    #   e             = exp(-|x|)
    #   log_sig(y)    = min(y, 0) - log1p(e)
    #   sig(-y)       = e/(1+e) if y >= 0 else 1/(1+e)   (always >= 0)
    e = jnp.exp(-jnp.abs(x))
    lp = jnp.log1p(e)
    log_sig = jnp.minimum(x_eff, 0.0) - lp
    inv = pl.reciprocal(1.0 + e, approx=True)          # near-free EUP rcp
    sig_neg = jnp.where(x_eff >= 0, e * inv, inv)      # sigmoid(-x_eff) >= 0

    # sig_neg ** gamma: small integer gammas via repeated multiply (no EUP
    # exp/log pair); generic path computes a single pow.
    g = float(gamma)
    if g.is_integer() and 1 <= int(g) <= 4:
        wpow = sig_neg
        for _ in range(int(g) - 1):
            wpow = wpow * sig_neg
    elif g == 0.0:
        wpow = jnp.ones_like(sig_neg)
    else:
        wpow = sig_neg ** g

    contrib = w * (wpow * log_sig)

    # Single fused reduction per tile -> scalar partial.
    partial_ref[0, 0] = -jnp.sum(contrib)


def focal_loss_sigmoid_multilabel(inputs, target, *, classes, gamma=2,
                                  alpha=0.25, tile_n=None):
    """JAX/Pallas equivalent of FocalLossWithSigmoidMultiLabel(classes, gamma, alpha)."""
    N, C = inputs.shape
    target = target.reshape(N, classes).astype(jnp.int32)

    # Lane-dense class dimension: pad C to a multiple of 128 with -30 logits
    # (targets never reference padded columns, so they land on the negative
    # branch and contribute ~0).
    c_pad = _round_up(C, 128)
    if c_pad != C:
        inputs = jnp.pad(inputs, ((0, 0), (0, c_pad - C)),
                         constant_values=_PAD_LOGIT)

    itemsize = jnp.dtype(inputs.dtype).itemsize
    if tile_n is None:
        # ~4 MiB input block (double-buffered => ~8 MiB per input stream),
        # dtype-aware, rounded to a multiple of 8 sublanes.
        tile_n = max(8, ((4 * 1024 * 1024) // (c_pad * itemsize)) // 8 * 8)
    tile_n = max(8, (tile_n // 8) * 8)
    tile_n = min(tile_n, _round_up(N, 8))

    # Guarantee >= 2 grid steps when possible so the "parallel" axis can shard
    # across both v7x TensorCores (one tile would leave a TC idle).
    if pl.cdiv(N, tile_n) < 2 and N > 8:
        tile_n = max(8, _round_up(pl.cdiv(N, 2), 8))

    n_pad = _round_up(N, tile_n)
    num_tiles = n_pad // tile_n
    if n_pad != N:
        # Padded rows: -30 logits + out-of-range labels => contribution ~0,
        # so no per-element mask is needed in the kernel hot loop.
        inputs = jnp.pad(inputs, ((0, n_pad - N), (0, 0)),
                         constant_values=_PAD_LOGIT)
        target = jnp.pad(target, ((0, n_pad - N), (0, 0)),
                         constant_values=c_pad)   # never matches any column

    kernel = functools.partial(_focal_kernel, gamma=gamma, alpha=float(alpha),
                               classes=classes)

    partials = pl.pallas_call(
        kernel,
        out_shape=jax.ShapeDtypeStruct((num_tiles, 1), jnp.float32),
        grid=(num_tiles,),
        in_specs=[
            pl.BlockSpec((tile_n, c_pad), lambda i: (i, 0)),
            pl.BlockSpec((tile_n, classes), lambda i: (i, 0)),
        ],
        out_specs=pl.BlockSpec((1, 1), lambda i: (i, 0),
                               memory_space=pltpu.MemorySpace.SMEM),
        compiler_params=pltpu.CompilerParams(
            dimension_semantics=("parallel",),      # v7x: shard tiles over 2 TCs
            vmem_limit_bytes=32 * 1024 * 1024),     # safe on v5e/v6e/v7x (64 MiB)
    )(inputs, target)

    # Tiny final reduction over per-tile partials (outside the kernel).
    return jnp.sum(partials)


def _reference_loss(inputs, target, *, classes, gamma=2, alpha=0.25):
    """Pure-JAX reference matching the PyTorch forward."""
    N, C = inputs.shape
    target = target.reshape(N, classes)
    onehot = jnp.max(jax.nn.one_hot(target, C, dtype=jnp.float32), axis=1)
    sig = jax.nn.sigmoid(inputs.astype(jnp.float32))
    pos = onehot > 0
    pos_sig = jnp.where(pos, sig, 1.0)
    neg_sig = jnp.where(pos, 0.0, sig)
    pos_term = jnp.sum((1.0 - pos_sig) ** gamma * jnp.log(pos_sig))
    neg_term = jnp.sum(neg_sig ** gamma * jnp.log(1.0 - neg_sig))
    return -pos_term * alpha - neg_term * (1.0 - alpha)


if __name__ == "__main__":
    key = jax.random.PRNGKey(0)
    k1, k2, k3, k4 = jax.random.split(key, 4)

    # Small demo shapes: batch=8, logit classes=128, 3 labels per sample.
    N, C, CLASSES = 8, 128, 3
    inputs = jax.random.normal(k1, (N, C), dtype=jnp.float32)
    target = jax.random.randint(k2, (N, CLASSES), 0, C, dtype=jnp.int32)

    loss = focal_loss_sigmoid_multilabel(inputs, target, classes=CLASSES,
                                         gamma=2, alpha=0.25)
    jax.block_until_ready(loss)
    ref = _reference_loss(inputs, target, classes=CLASSES, gamma=2, alpha=0.25)
    np.testing.assert_allclose(np.asarray(loss), np.asarray(ref),
                               rtol=5e-3, atol=5e-3)

    # Second check: multiple tiles, row padding (N not a tile multiple) and a
    # non-128-multiple class count (class-dim padding path).
    N2, C2, CLASSES2 = 45, 200, 4
    inputs2 = jax.random.normal(k3, (N2, C2), dtype=jnp.float32)
    target2 = jax.random.randint(k4, (N2, CLASSES2), 0, C2, dtype=jnp.int32)
    loss2 = focal_loss_sigmoid_multilabel(inputs2, target2, classes=CLASSES2,
                                          gamma=2, alpha=0.25, tile_n=16)
    jax.block_until_ready(loss2)
    ref2 = _reference_loss(inputs2, target2, classes=CLASSES2,
                           gamma=2, alpha=0.25)
    np.testing.assert_allclose(np.asarray(loss2), np.asarray(ref2),
                               rtol=5e-3, atol=5e-3)

    print("KERNEL_OK")
</pallas_src>

<mosaic_0001>
module attributes {stable_mosaic.version = 11 : i64} {
  func.func @_focal_kernel(%arg0: i32, %arg1: memref<8x128xf32, #tpu.memory_space<vmem>>, %arg2: memref<8x3xi32, #tpu.memory_space<vmem>>, %arg3: memref<1x1xf32, #tpu.memory_space<smem>>) attributes {dimension_semantics = [#tpu.dimension_semantics<parallel>], iteration_bounds = array<i64: 1>, scalar_prefetch = 0 : i64, scratch_operands = 0 : i64, tpu.core_type = #tpu.core_type<tc>, window_params = [{transform_indices = @transform_0, window_bounds = array<i64: 8, 128>}, {transform_indices = @transform_1, window_bounds = array<i64: 8, 3>}, {transform_indices = @transform_2, window_bounds = array<i64: 1, 1>}]} {
    %c0 = arith.constant 0 : index
    %c0_0 = arith.constant 0 : index
    %0 = vector.load %arg1[%c0, %c0_0] : memref<8x128xf32, #tpu.memory_space<vmem>>, vector<8x128xf32>
    %c0_1 = arith.constant 0 : index
    %c0_2 = arith.constant 0 : index
    %1 = vector.load %arg2[%c0_1, %c0_2] : memref<8x3xi32, #tpu.memory_space<vmem>>, vector<8x3xi32>
    %2 = tpu.iota {dimensions = array<i32: 1>} : vector<8x128xi32>
    %3 = vector.extract_strided_slice %1 {offsets = [0, 0], sizes = [8, 1], strides = [1, 1]} : vector<8x3xi32> to vector<8x1xi32>
    %4 = vector.broadcast %3 : vector<8x1xi32> to vector<8x128xi32>
    %5 = arith.cmpi eq, %2, %4 : vector<8x128xi32>
    %6 = vector.extract_strided_slice %1 {offsets = [0, 1], sizes = [8, 1], strides = [1, 1]} : vector<8x3xi32> to vector<8x1xi32>
    %7 = vector.broadcast %6 : vector<8x1xi32> to vector<8x128xi32>
    %8 = arith.cmpi eq, %2, %7 : vector<8x128xi32>
    %9 = arith.ori %5, %8 : vector<8x128xi1>
    %10 = vector.extract_strided_slice %1 {offsets = [0, 2], sizes = [8, 1], strides = [1, 1]} : vector<8x3xi32> to vector<8x1xi32>
    %11 = vector.broadcast %10 : vector<8x1xi32> to vector<8x128xi32>
    %12 = arith.cmpi eq, %2, %11 : vector<8x128xi32>
    %13 = arith.ori %9, %12 : vector<8x128xi1>
    %cst = arith.constant 0.000000e+00 : f32
    %14 = vector.broadcast %cst : f32 to vector<8x128xf32>
    %15 = arith.subf %14, %0 : vector<8x128xf32>
    %16 = arith.select %13, %0, %15 : vector<8x128xi1>, vector<8x128xf32>
    %cst_3 = arith.constant 2.500000e-01 : f32
    %cst_4 = arith.constant 7.500000e-01 : f32
    %17 = vector.broadcast %cst_3 : f32 to vector<8x128xf32>
    %18 = vector.broadcast %cst_4 : f32 to vector<8x128xf32>
    %19 = arith.select %13, %17, %18 : vector<8x128xi1>, vector<8x128xf32>
    %20 = math.absf %0 : vector<8x128xf32>
    %cst_5 = arith.constant 0.000000e+00 : f32
    %21 = vector.broadcast %cst_5 : f32 to vector<8x128xf32>
    %22 = arith.subf %21, %20 : vector<8x128xf32>
    %23 = math.exp %22 : vector<8x128xf32>
    %24 = math.log1p %23 : vector<8x128xf32>
    %cst_6 = arith.constant 0.000000e+00 : f32
    %25 = vector.broadcast %cst_6 : f32 to vector<8x128xf32>
    %26 = arith.minimumf %16, %25 : vector<8x128xf32>
    %27 = arith.subf %26, %24 : vector<8x128xf32>
    %cst_7 = arith.constant 1.000000e+00 : f32
    %28 = vector.broadcast %cst_7 : f32 to vector<8x128xf32>
    %29 = arith.addf %28, %23 : vector<8x128xf32>
    %30 = tpu.reciprocal %29 {approx = true} : vector<8x128xf32> -> vector<8x128xf32>
    %cst_8 = arith.constant 0.000000e+00 : f32
    %31 = vector.broadcast %cst_8 : f32 to vector<8x128xf32>
    %32 = arith.cmpf oge, %16, %31 : vector<8x128xf32>
    %33 = arith.mulf %23, %30 : vector<8x128xf32>
    %34 = arith.select %32, %33, %30 : vector<8x128xi1>, vector<8x128xf32>
    %35 = arith.mulf %34, %34 : vector<8x128xf32>
    %36 = arith.mulf %35, %27 : vector<8x128xf32>
    %37 = arith.mulf %19, %36 : vector<8x128xf32>
    %38 = vector.shape_cast %37 : vector<8x128xf32> to vector<1x8x128xf32>
    %cst_9 = arith.constant dense<0.000000e+00> : vector<1xf32>
    %39 = vector.multi_reduction <add>, %38, %cst_9 [1, 2] : vector<1x8x128xf32> to vector<1xf32>
    %40 = vector.shape_cast %39 : vector<1xf32> to vector<1x1x1xf32>
    %41 = vector.extract %40[0, 0, 0] : f32 from vector<1x1x1xf32>
    %cst_10 = arith.constant 0.000000e+00 : f32
    %42 = arith.subf %cst_10, %41 : f32
    %c0_11 = arith.constant 0 : index
    %c0_12 = arith.constant 0 : index
    %43 = memref.load %arg3[%c0_11, %c0_12] : memref<1x1xf32, #tpu.memory_space<smem>>
    memref.store %42, %arg3[%c0_11, %c0_12] : memref<1x1xf32, #tpu.memory_space<smem>>
    return
  }
  func.func @transform_0(%arg0: i32) -> (i32, i32) {
    %c0_i32 = arith.constant 0 : i32
    %c0_i32_0 = arith.constant 0 : i32
    return %arg0, %c0_i32 : i32, i32
  }
  func.func @transform_1(%arg0: i32) -> (i32, i32) {
    %c0_i32 = arith.constant 0 : i32
    %c0_i32_0 = arith.constant 0 : i32
    return %arg0, %c0_i32 : i32, i32
  }
  func.func @transform_2(%arg0: i32) -> (i32, i32) {
    %c0_i32 = arith.constant 0 : i32
    %c0_i32_0 = arith.constant 0 : i32
    return %arg0, %c0_i32 : i32, i32
  }
}

</mosaic_0001>

<llo_original>
// kernel: tpu_custom_call.1
$region0: #{tpu_custom_call.1}
  #allocation0 [shape = 'u32[]', space=smem, size = 0x4, offset = 0x4, fixed_abs, tag = 'smem constant byte address 0x4 - core index']
  #allocation1 [shape = 'u32[72,128]{1,0:T(1,128)}', space=vmem, size = 0x9000, scoped, tag = 'internal scratch']
  %s0 = inlined_call_operand.vmem [shape: f32[8,128], index: 0, kind: input, shape index: {}]
  %s1 = inlined_call_operand.vmem [shape: s32[8,3], index: 1, kind: input, shape index: {}]
  %s2 = inlined_call_operand.hbm [shape: f32[1,1], index: 2, kind: output, shape index: {}]
  %s3 = sld [smem:[#allocation0]]
  $region18: #{tpu_custom_call.1} parent=0
    _
  %s5 = ssub.s32 1, %s3
  %s6 = scalar_select 0, %s5, %s3
  $region1: #{tpu_custom_call.1} parent=0
    #allocation2 [shape = 'u8[512]{0}', space=smem, size = 0x200, scoped, tag = 'output window, operand 0, single buffered']
    #allocation3 [shape = 's32[1]{0}', space=sflag, size = 0x4, scoped, tag = 'scoped memory for tpu_custom_call.1']
    %7 = vsyncpa [#allocation3], 0
    // Predicated region
    $region2: #{tpu_custom_call.1} parent=1 // pred_check
      _
    $region3: #{tpu_custom_call.1} parent=1 // pred_check_branch
      %9 = sbr.rel (0) target = $region5
    $region4: #{tpu_custom_call.1} parent=1 // pred_region
      _
    $region5: #{tpu_custom_call.1} parent=1 // pred_fallthru
      _
    // Predicated region
    $region6: #{tpu_custom_call.1} parent=1 // pred_check
      _
    $region7: #{tpu_custom_call.1} parent=1 // pred_check_branch
      %11 = sbr.rel (0) target = $region9
    $region8: #{tpu_custom_call.1} parent=1 // pred_region
      _
    $region9: #{tpu_custom_call.1} parent=1 // pred_fallthru
      _
    %v12 = vld [vmem:[%s0] sm:$0xff]
    %v13 = vld [vmem:[%s1] sm:$0xff]
    %v14 = vlaneseq
    %v15 = vand.u32 %v14, 127
    %16 = vset.pattern.permute.xlu0 0
    %17 = vperm.xlu0 %16, %v13
    %v18 = vpop.permute.xlu0 %17
    %vm19 = vcmp.eq.s32.totalorder %v15, %v18
    %20 = vset.pattern.permute.xlu0 1
    %21 = vperm.xlu0 %20, %v13
    %v22 = vpop.permute.xlu0 %21
    %vm23 = vcmp.eq.s32.totalorder %v15, %v22
    %vm24 = vmor %vm19, %vm23
    %25 = vset.pattern.permute.xlu0 2
    %26 = vperm.xlu0 %25, %v13
    %v27 = vpop.permute.xlu0 %26
    %vm28 = vcmp.eq.s32.totalorder %v15, %v27
    %vm29 = vmor %vm24, %vm28
    %v30 = vsub.f32 0.0, %v12
    %v31 = vsel %vm29, %v12, %v30
    %v32 = vsel %vm29, 0.25, 0.75
    %v33 = vand.u32 2147483647, %v12
    %v34 = vsub.f32 0.0, %v33
    %v35 = vmul.f32 %v34, 1.442695
    %v36 = vpow.pop %v35
    %v37 = vadd.f32 %v36, 1.0
    %v38 = vlog2.pop %v37
    %v39 = vmul.f32 %v38, 0.6931472
    %v40 = vmul.f32 -0.5, %v36
    %v41 = vadd.f32 %v40, 1.0
    %v42 = vmul.f32 %v41, %v36
    %v43 = vand.u32 2147483647, %v36
    %vm44 = vcmp.lt.f32.partialorder %v43, 0.0004427343
    %v45 = vsel %vm44, %v42, %v39
    %v46 = vmin.f32 %v31, 0.0
    %v47 = vsub.f32 %v46, %v45
    %v48 = vadd.f32 %v36, 1.0
    %v49 = vrcp.pop %v48
    %vm50 = vcmp.ge.f32.partialorder %v31, 0.0
    %v51 = vmul.f32 %v36, %v49
    %v52 = vsel %vm50, %v51, %v49
    %v53 = vmul.f32 %v52, %v52
    %v54 = vmul.f32 %v53, %v47
    %v55 = vmul.f32 %v32, %v54
    %56 = vadd.xlane.f32.xlu0 %v55
    %v57 = vpop.xlane.xlu0 %56
    %v58 = vrot.slane %v57, 4
    %v59 = vadd.f32 %v57, %v58
    %v60 = vrot.slane %v59, 2
    %v61 = vadd.f32 %v59, %v60
    %v62 = vrot.slane %v61, 1
    %v63 = vadd.f32 %v61, %v62
    %s64 = vtos %v63
    %s65 = ssub.f32 0.0, %s64
    %s66 = scalar_lea.smem [#allocation2], 0
    %67 = sst [smem:[%s66]] %s65
    // Predicated region
    $region10: #{tpu_custom_call.1} parent=1 // pred_check
      _
    $region11: #{tpu_custom_call.1} parent=1 // pred_check_branch
      %69 = sbr.rel (0) target = $region13
    $region12: #{tpu_custom_call.1} parent=1 // pred_region
      %71 = vsyncadd [#allocation3], 0
      %s73 = sshll.u32 %s2, 4
      %s74 = int_to_ptr.hbm [resolvable:$true] %s73
      %76 = dma.smem_to_hbm [#allocation2], 16, %s74, [#allocation3]
    $region13: #{tpu_custom_call.1} parent=1 // pred_fallthru
      _
    // Predicated region
    $region14: #{tpu_custom_call.1} parent=1 // pred_check
      _
    $region15: #{tpu_custom_call.1} parent=1 // pred_check_branch
      %78 = sbr.rel (0) target = $region17
    $region16: #{tpu_custom_call.1} parent=1 // pred_region
      %80 = dma.done [#allocation3], 16
    $region17: #{tpu_custom_call.1} parent=1 // pred_fallthru
      _
    %81 = sfence
    %82 = vsyncpa [#allocation3], 1

</llo_original>
